<compile_context>
chip_gen: v7x
topology: tpu7x:2x2x1
jax: 0.10.0
libtpu: 0.0.40
codegen_flags: <defaults>
</compile_context>

<pallas_src>
import jax
import jax.numpy as jnp
from jax.experimental import pallas as pl
from jax.experimental.pallas import tpu as pltpu


# ----------------------------- kernel bodies ---------------------------------

def _aspp_pooling_body(x_ref, w_ref, bias_ref, ones_ref, o_ref, acc_ref):
    # One grid step: (batch b, Cin-tile k)
    #   x_ref:    (TC, HW)            lane-dense chunk of one image (batch dim squeezed)
    #   w_ref:    (num_k, Cout, TC)   full folded weight, grid-resident (DMA'd once)
    #   bias_ref: (Cout, 1)           folded BN bias
    #   ones_ref: (HW, 1) or None     ones column in x dtype (MXU reduction path)
    #   o_ref:    (Cout, HW)          output block for this image (written on last k)
    #   acc_ref:  (Cout, 1)           f32 VMEM accumulator over Cin tiles
    k = pl.program_id(1)

    @pl.when(k == 0)
    def _init():
        acc_ref[...] = jnp.zeros_like(acc_ref)

    if ones_ref is not None:
        # Sub-f32 inputs: per-channel spatial sums on the MXU (exact f32 accumulation).
        # No materialized f32 copy of the x tile; VPU/vld slots stay free for the DMA.
        tile_sum = jnp.dot(x_ref[...], ones_ref[...],
                           preferred_element_type=jnp.float32)           # (TC, 1)
    else:
        # f32 inputs: plain VPU/XLU reduction (input already f32, no cast temporary).
        tile_sum = jnp.sum(x_ref[...], axis=1, keepdims=True)            # (TC, 1)

    # Grid-resident folded weight; pick this Cin chunk by leading-dim dynamic index.
    w_slice = w_ref[k]                                                   # (Cout, TC) f32
    acc_ref[...] += jnp.dot(w_slice, tile_sum,
                            preferred_element_type=jnp.float32)          # (Cout, 1)

    @pl.when(k == pl.num_programs(1) - 1)
    def _finalize():
        # BN scale and 1/(H*W) are already folded into the weight; add bias, ReLU.
        y = jnp.maximum(acc_ref[...] + bias_ref[...], 0.0)               # (Cout, 1) f32
        # Upsampling from a 1x1 source is a constant broadcast for any interpolate mode.
        # Cast before broadcasting so no (Cout, HW) f32 temporary is materialized.
        o_ref[...] = jnp.broadcast_to(y.astype(o_ref.dtype), o_ref.shape)


def _kernel_with_ones(x_ref, w_ref, bias_ref, ones_ref, o_ref, acc_ref):
    _aspp_pooling_body(x_ref, w_ref, bias_ref, ones_ref, o_ref, acc_ref)


def _kernel_no_ones(x_ref, w_ref, bias_ref, o_ref, acc_ref):
    _aspp_pooling_body(x_ref, w_ref, bias_ref, None, o_ref, acc_ref)


# ----------------------------- sizing helpers ---------------------------------

def _tpu_vmem_bytes():
    """Physical per-core VMEM (best effort); conservative 64 MiB fallback (v7x)."""
    try:
        info = pltpu.get_tpu_info()
        v = getattr(info, "vmem_capacity_bytes", None)
        if v:
            return int(v)
    except Exception:
        pass
    return 64 << 20


def _choose_cin_tile(cin, hw, itemsize, target_bytes):
    """Largest sublane-granular divisor of cin whose (tile, HW) block fits target_bytes."""
    gran = max(8, 32 // max(itemsize, 1))          # 8 for f32, 16 for bf16, 32 for int8
    if cin % gran != 0 or cin <= gran:
        # TODO(synk): irregular channel counts fall back to a single (Cin, HW) block,
        # which can exceed VMEM for very large Cin*HW; real ASPP backbones are regular.
        return cin
    max_rows = max(gran, target_bytes // max(hw * itemsize, 1))
    divs = [t for t in range(gran, cin + 1, gran) if cin % t == 0]
    fitting = [t for t in divs if t <= max_rows]
    return max(fitting) if fitting else min(divs)


def _vmem_limit_bytes(cin_tile, hw, cout, num_k, x_itemsize, o_itemsize, cap, use_ones):
    lane = 128
    rup = lambda v, m: ((v + m - 1) // m) * m
    est = (2 * cin_tile * hw * x_itemsize                 # double-buffered x blocks
           + 2 * cout * hw * o_itemsize                   # resident output block (2 bufs)
           + 2 * num_k * cout * rup(cin_tile, lane) * 4   # resident folded weight (f32)
           + cout * rup(cin_tile, lane) * 4               # in-kernel weight-chunk load
           + 2 * cout * lane * 4                          # bias block (lane padded)
           + cout * lane * 4                              # accumulator scratch
           + cin_tile * lane * 4)                         # tile_sum temporary
    if use_ones:
        est += 2 * rup(hw, 8) * lane * x_itemsize         # resident ones column
    est = int(est * 1.2) + (2 << 20)
    return int(min(max(est, 16 << 20), cap))


# ----------------------------- wrapper -----------------------------------------

def aspp_pooling(x, conv_w, bn_gamma, bn_beta, bn_mean, bn_var, eps=1e-5, cin_tile=None):
    """x: (B, Cin, H, W); conv_w: (Cout, Cin); bn_*: (Cout,). Returns (B, Cout, H, W), x.dtype."""
    B, Cin, H, W = x.shape
    Cout = conv_w.shape[0]
    HW = H * W

    # Fold BN into the conv and fold 1/(H*W) into the weight:
    #   out = (conv_w * scale / HW) @ sum_hw(x) + (beta - mean * scale), then ReLU.
    scale = (bn_gamma / jnp.sqrt(bn_var + eps)).astype(jnp.float32)              # (Cout,)
    w_fold = conv_w.astype(jnp.float32) * (scale / float(HW))[:, None]           # (Cout, Cin)
    bias = (bn_beta.astype(jnp.float32)
            - bn_mean.astype(jnp.float32) * scale).reshape(Cout, 1)              # (Cout, 1)

    # Lane-dense layout: flatten the spatial dims (free, contiguous reshape).
    x_flat = x.reshape(B, Cin, HW)
    x_itemsize = jnp.dtype(x.dtype).itemsize
    o_itemsize = x_itemsize

    # Generation-aware sizing: bigger blocks / higher cap on 128-MiB parts (v5e/v6e),
    # conservative on v7x (64 MiB per TensorCore).
    vmem_phys = _tpu_vmem_bytes()
    target_block = max(2 << 20, min(12 << 20, vmem_phys // 10))
    vmem_cap = max(32 << 20, min(int(vmem_phys * 3 // 4), 96 << 20))

    gran = max(8, 32 // max(x_itemsize, 1))
    if cin_tile is None:
        cin_tile = _choose_cin_tile(Cin, HW, x_itemsize, target_block)
    assert Cin % cin_tile == 0 and (cin_tile == Cin or cin_tile % gran == 0), (
        "cin_tile must divide Cin and be either Cin or a multiple of the sublane "
        f"granularity ({gran})")
    num_k = Cin // cin_tile

    # Resident weight, chunked along Cin so the kernel indexes its slice on the
    # leading dim: w3[k] == w_fold[:, k*cin_tile:(k+1)*cin_tile].
    w3 = w_fold.reshape(Cout, num_k, cin_tile).transpose(1, 0, 2)                # (num_k, Cout, TC)

    use_mxu_sum = x.dtype != jnp.float32   # keep exact f32 VPU sum for f32 inputs

    in_specs = [
        pl.BlockSpec((None, cin_tile, HW), lambda b, k: (b, k, 0)),      # x chunk
        pl.BlockSpec((num_k, Cout, cin_tile), lambda b, k: (0, 0, 0)),   # resident weight
        pl.BlockSpec((Cout, 1), lambda b, k: (0, 0)),                    # folded BN bias
    ]
    operands = [x_flat, w3, bias]
    if use_mxu_sum:
        in_specs.append(pl.BlockSpec((HW, 1), lambda b, k: (0, 0)))      # ones column
        operands.append(jnp.ones((HW, 1), dtype=x.dtype))
        kernel = _kernel_with_ones
    else:
        kernel = _kernel_no_ones

    grid_spec = pltpu.PrefetchScalarGridSpec(
        num_scalar_prefetch=0,
        grid=(B, num_k),                                    # reduction (Cin) axis last
        in_specs=in_specs,
        out_specs=pl.BlockSpec((None, Cout, HW), lambda b, k: (b, 0, 0)),
        scratch_shapes=[pltpu.VMEM((Cout, 1), jnp.float32)],
    )

    out_flat = pl.pallas_call(
        kernel,
        out_shape=jax.ShapeDtypeStruct((B, Cout, HW), x.dtype),
        grid_spec=grid_spec,
        compiler_params=pltpu.CompilerParams(
            dimension_semantics=("parallel", "arbitrary"),
            vmem_limit_bytes=_vmem_limit_bytes(
                cin_tile, HW, Cout, num_k, x_itemsize, o_itemsize, vmem_cap, use_mxu_sum),
        ),
    )(*operands)

    return out_flat.reshape(B, Cout, H, W)


# ----------------------------- reference ---------------------------------------

def aspp_pooling_reference(x, conv_w, bn_gamma, bn_beta, bn_mean, bn_var, eps=1e-5):
    B, Cin, H, W = x.shape
    pooled = jnp.mean(x.astype(jnp.float32), axis=(2, 3))                        # (B, Cin)
    y = jnp.einsum("bc,oc->bo", pooled, conv_w.astype(jnp.float32),
                   precision=jax.lax.Precision.HIGHEST)                          # (B, Cout)
    y = (y - bn_mean) / jnp.sqrt(bn_var + eps) * bn_gamma + bn_beta
    y = jnp.maximum(y, 0.0)
    return jnp.broadcast_to(y[:, :, None, None],
                            (B, conv_w.shape[0], H, W)).astype(x.dtype)


if __name__ == "__main__":
    # --- Case 1: small shapes implied by the module (B=2, C=4, 16x16), f32 --------
    B, Cin, Cout, H, W = 2, 4, 4, 16, 16
    k_x, k_w, k_g, k_b, k_m, k_v = jax.random.split(jax.random.PRNGKey(0), 6)
    x = jax.random.normal(k_x, (B, Cin, H, W), dtype=jnp.float32)
    conv_w = jax.random.normal(k_w, (Cout, Cin), dtype=jnp.float32) * 0.1
    bn_gamma = 1.0 + 0.1 * jax.random.normal(k_g, (Cout,), dtype=jnp.float32)
    bn_beta = 0.1 * jax.random.normal(k_b, (Cout,), dtype=jnp.float32)
    bn_mean = 0.05 * jax.random.normal(k_m, (Cout,), dtype=jnp.float32)
    bn_var = jnp.abs(1.0 + 0.1 * jax.random.normal(k_v, (Cout,), dtype=jnp.float32))

    out = jax.block_until_ready(
        aspp_pooling(x, conv_w, bn_gamma, bn_beta, bn_mean, bn_var))
    ref = aspp_pooling_reference(x, conv_w, bn_gamma, bn_beta, bn_mean, bn_var)
    assert out.shape == (B, Cout, H, W)
    assert jnp.allclose(out, ref, atol=1e-5, rtol=1e-5), "mismatch (small case)"

    # --- Case 2: tiled-Cin reduction + resident-weight indexing (f32, 2 k-steps) ---
    B2, Cin2, Cout2, H2, W2 = 2, 256, 8, 16, 16
    k2 = jax.random.split(jax.random.PRNGKey(1), 6)
    x2 = jax.random.normal(k2[0], (B2, Cin2, H2, W2), dtype=jnp.float32)
    conv_w2 = jax.random.normal(k2[1], (Cout2, Cin2), dtype=jnp.float32) * 0.05
    g2 = 1.0 + 0.1 * jax.random.normal(k2[2], (Cout2,), dtype=jnp.float32)
    b2 = 0.1 * jax.random.normal(k2[3], (Cout2,), dtype=jnp.float32)
    m2 = 0.05 * jax.random.normal(k2[4], (Cout2,), dtype=jnp.float32)
    v2 = jnp.abs(1.0 + 0.1 * jax.random.normal(k2[5], (Cout2,), dtype=jnp.float32))

    out2 = jax.block_until_ready(
        aspp_pooling(x2, conv_w2, g2, b2, m2, v2, cin_tile=128))
    ref2 = aspp_pooling_reference(x2, conv_w2, g2, b2, m2, v2)
    assert out2.shape == (B2, Cout2, H2, W2)
    assert jnp.allclose(out2, ref2, atol=2e-3, rtol=2e-3), "mismatch (tiled case)"

    # --- Case 3: bf16 input -> MXU-ones reduction path, relaxed (64-row) tiles -----
    x3 = x2.astype(jnp.bfloat16)
    out3 = jax.block_until_ready(
        aspp_pooling(x3, conv_w2, g2, b2, m2, v2, cin_tile=64))
    ref3 = aspp_pooling_reference(x3, conv_w2, g2, b2, m2, v2)
    assert out3.shape == (B2, Cout2, H2, W2)
    assert jnp.allclose(out3.astype(jnp.float32), ref3.astype(jnp.float32),
                        atol=1e-2, rtol=1e-2), "mismatch (bf16 case)"

    print("KERNEL_OK")
</pallas_src>

<mosaic_0001>
module attributes {stable_mosaic.version = 11 : i64} {
  func.func @_kernel_no_ones(%arg0: i32, %arg1: i32, %arg2: memref<1x4x256xf32, #tpu.memory_space<vmem>>, %arg3: memref<1x4x4xf32, #tpu.memory_space<vmem>>, %arg4: memref<4x1xf32, #tpu.memory_space<vmem>>, %arg5: memref<1x4x256xf32, #tpu.memory_space<vmem>>, %arg6: memref<4x1xf32, #tpu.memory_space<vmem>>) attributes {dimension_semantics = [#tpu.dimension_semantics<parallel>, #tpu.dimension_semantics<arbitrary>], iteration_bounds = array<i64: 2, 1>, scalar_prefetch = 0 : i64, scratch_operands = 1 : i64, tpu.core_type = #tpu.core_type<tc>, window_params = [{transform_indices = @transform_0, window_bounds = array<i64: 1, 4, 256>}, {pipeline_mode = #tpu.pipeline_mode<synchronous>, transform_indices = @transform_1, window_bounds = array<i64: 1, 4, 4>}, {pipeline_mode = #tpu.pipeline_mode<synchronous>, transform_indices = @transform_2, window_bounds = array<i64: 4, 1>}, {transform_indices = @transform_3, window_bounds = array<i64: 1, 4, 256>}]} {
    %c0_i32 = arith.constant 0 : i32
    %0 = arith.cmpi eq, %arg1, %c0_i32 : i32
    %1 = arith.extui %0 : i1 to i32
    %c0_i32_0 = arith.constant 0 : i32
    %2 = arith.cmpi ne, %1, %c0_i32_0 : i32
    scf.if %2 {
      %cst_12 = arith.constant 0.000000e+00 : f32
      %17 = vector.broadcast %cst_12 : f32 to vector<4x1xf32>
      %c0_13 = arith.constant 0 : index
      %c0_14 = arith.constant 0 : index
      %18 = vector.load %arg6[%c0_13, %c0_14] : memref<4x1xf32, #tpu.memory_space<vmem>>, vector<4x1xf32>
      tpu.vector_store %arg6[%c0_13, %c0_14], %17 {strides = array<i32>} : memref<4x1xf32, #tpu.memory_space<vmem>>, vector<4x1xf32>,
    } else {
    }
    %c0 = arith.constant 0 : index
    %c0_1 = arith.constant 0 : index
    %c0_2 = arith.constant 0 : index
    %3 = vector.load %arg2[%c0, %c0_1, %c0_2] : memref<1x4x256xf32, #tpu.memory_space<vmem>>, vector<1x4x256xf32>
    %4 = vector.shape_cast %3 : vector<1x4x256xf32> to vector<4x256xf32>
    %cst = arith.constant dense<0.000000e+00> : vector<4xf32>
    %5 = vector.multi_reduction <add>, %4, %cst [1] : vector<4x256xf32> to vector<4xf32>
    %6 = vector.shape_cast %5 : vector<4xf32> to vector<4x1xf32>
    %7 = arith.index_cast %arg1 : i32 to index
    %c0_3 = arith.constant 0 : index
    %c0_4 = arith.constant 0 : index
    %8 = vector.load %arg3[%7, %c0_3, %c0_4] : memref<1x4x4xf32, #tpu.memory_space<vmem>>, vector<1x4x4xf32>
    %9 = vector.shape_cast %8 : vector<1x4x4xf32> to vector<4x4xf32>
    %c0_5 = arith.constant 0 : index
    %c0_6 = arith.constant 0 : index
    %10 = vector.load %arg6[%c0_5, %c0_6] : memref<4x1xf32, #tpu.memory_space<vmem>>, vector<4x1xf32>
    %cst_7 = arith.constant dense<0.000000e+00> : vector<4x1xf32>
    %11 = tpu.matmul %9, %6, %cst_7 {dimension_numbers = #tpu.dot_dimension_numbers<[1], [0], [0], [1], [0, 0, 1, 1], [], []>} : vector<4x4xf32>, vector<4x1xf32>, vector<4x1xf32> -> vector<4x1xf32>
    %12 = arith.addf %10, %11 : vector<4x1xf32>
    %c0_8 = arith.constant 0 : index
    %c0_9 = arith.constant 0 : index
    %13 = vector.load %arg6[%c0_8, %c0_9] : memref<4x1xf32, #tpu.memory_space<vmem>>, vector<4x1xf32>
    tpu.vector_store %arg6[%c0_8, %c0_9], %12 {strides = array<i32>} : memref<4x1xf32, #tpu.memory_space<vmem>>, vector<4x1xf32>,
    %c0_i32_10 = arith.constant 0 : i32
    %14 = arith.cmpi eq, %arg1, %c0_i32_10 : i32
    %15 = arith.extui %14 : i1 to i32
    %c0_i32_11 = arith.constant 0 : i32
    %16 = arith.cmpi ne, %15, %c0_i32_11 : i32
    scf.if %16 {
      %c0_12 = arith.constant 0 : index
      %c0_13 = arith.constant 0 : index
      %17 = vector.load %arg6[%c0_12, %c0_13] : memref<4x1xf32, #tpu.memory_space<vmem>>, vector<4x1xf32>
      %c0_14 = arith.constant 0 : index
      %c0_15 = arith.constant 0 : index
      %18 = vector.load %arg4[%c0_14, %c0_15] : memref<4x1xf32, #tpu.memory_space<vmem>>, vector<4x1xf32>
      %19 = arith.addf %17, %18 : vector<4x1xf32>
      %cst_16 = arith.constant 0.000000e+00 : f32
      %20 = vector.broadcast %cst_16 : f32 to vector<4x1xf32>
      %21 = arith.maximumf %19, %20 : vector<4x1xf32>
      %22 = vector.shape_cast %21 : vector<4x1xf32> to vector<4x1xf32>
      %23 = vector.broadcast %22 : vector<4x1xf32> to vector<4x256xf32>
      %c0_17 = arith.constant 0 : index
      %c0_18 = arith.constant 0 : index
      %c0_19 = arith.constant 0 : index
      %24 = vector.load %arg5[%c0_17, %c0_18, %c0_19] : memref<1x4x256xf32, #tpu.memory_space<vmem>>, vector<1x4x256xf32>
      %25 = vector.shape_cast %24 : vector<1x4x256xf32> to vector<4x256xf32>
      %26 = vector.shape_cast %23 : vector<4x256xf32> to vector<1x4x256xf32>
      tpu.vector_store %arg5[%c0_17, %c0_18, %c0_19], %26 {strides = array<i32>} : memref<1x4x256xf32, #tpu.memory_space<vmem>>, vector<1x4x256xf32>,
    } else {
    }
    return
  }
  func.func @transform_0(%arg0: i32, %arg1: i32) -> (i32, i32, i32) {
    %c0_i32 = arith.constant 0 : i32
    %c0_i32_0 = arith.constant 0 : i32
    return %arg0, %arg1, %c0_i32 : i32, i32, i32
  }
  func.func @transform_1(%arg0: i32, %arg1: i32) -> (i32, i32, i32) {
    %c0_i32 = arith.constant 0 : i32
    %c0_i32_0 = arith.constant 0 : i32
    %c0_i32_1 = arith.constant 0 : i32
    %c0_i32_2 = arith.constant 0 : i32
    return %c0_i32, %c0_i32_0, %c0_i32_1 : i32, i32, i32
  }
  func.func @transform_2(%arg0: i32, %arg1: i32) -> (i32, i32) {
    %c0_i32 = arith.constant 0 : i32
    %c0_i32_0 = arith.constant 0 : i32
    %c0_i32_1 = arith.constant 0 : i32
    return %c0_i32, %c0_i32_0 : i32, i32
  }
  func.func @transform_3(%arg0: i32, %arg1: i32) -> (i32, i32, i32) {
    %c0_i32 = arith.constant 0 : i32
    %c0_i32_0 = arith.constant 0 : i32
    %c0_i32_1 = arith.constant 0 : i32
    return %arg0, %c0_i32, %c0_i32_0 : i32, i32, i32
  }
}

</mosaic_0001>

<llo_original>
// kernel: tpu_custom_call.1
$region0: #{tpu_custom_call.1}
  #allocation0 [shape = 'u32[]', space=smem, size = 0x4, offset = 0x4, fixed_abs, tag = 'smem constant byte address 0x4 - core index']
  #allocation1 [shape = 'u32[144,128]{1,0:T(1,128)}', space=vmem, size = 0x12000, scoped, tag = 'internal scratch']
  #allocation2 [shape = 'f32[4,1]{1,0:T(4,128)}', space=vmem, size = 0x800, scoped, tag = 'scratch operand']
  %s0 = inlined_call_operand.hbm [shape: f32[2,4,256], index: 0, kind: input, shape index: {}]
  %s1 = inlined_call_operand.vmem [shape: f32[1,4,4], index: 1, kind: input, shape index: {}]
  %s2 = inlined_call_operand.vmem [shape: f32[4,1], index: 2, kind: input, shape index: {}]
  %s3 = inlined_call_operand.hbm [shape: f32[2,4,256], index: 3, kind: output, shape index: {}]
  %s4 = sld [smem:[#allocation0]]
  $region57: #{tpu_custom_call.1} parent=0
    _
  %s6 = ssub.s32 1, %s4
  %s7 = scalar_select 0, %s6, %s4
  $region1: #{tpu_custom_call.1} parent=0
    #allocation3 [shape = 'u8[8192]{0}', space=vmem, size = 0x2000, scoped, tag = 'input window, operand 0']
    #allocation4 [shape = 's32[2]{0}', space=sflag, size = 0x8, scoped, tag = 'scoped memory for tpu_custom_call.1']
    #allocation5 [shape = 's32[2]{0}', space=sflag, size = 0x8, scoped, tag = 'scoped memory for tpu_custom_call.1']
    #allocation6 [shape = 'u8[8192]{0}', space=vmem, size = 0x2000, scoped, tag = 'output window, operand 0']
    %8 = vsyncpa [#allocation4], 0
    %s9 = scalar_lea.sflag [#allocation4], 1
    %10 = vsyncpa %s9, 0
    %11 = vsyncpa [#allocation5], 0
    %s12 = scalar_lea.sflag [#allocation5], 1
    %13 = vsyncpa %s12, 0
    loop: start=0, step=1, limit=4
    $region2: #{tpu_custom_call.1} parent=1 // loop_pre_header
      _
    $region3: #{tpu_custom_call.1} parent=1 // loop_header
      %s15 = sphi 0, %s19
      %p16 = scmp.ge.s32.totalorder %s15, 4
      %s22 = sphi 0, %s34
      %s23 = sphi 0, %s30
      %s24 = sphi 0, %s22
      %s25 = sphi 0, %s23
      %s26 = sphi 0, %s24
      %s27 = sphi 0, %s25
      %s39 = sphi 0, %s41
      %s42 = sphi 0, %s39
      %s43 = sphi 0, %s42
      %s59 = sphi 0, %s43
      %s63 = sphi 0, %s63
      %s65 = sphi 0, %s63
      %s66 = sphi 0, %s65
      %s80 = sphi 0, %s66
      %s84 = sphi 0, %s84
      %s86 = sphi 0, %s84
      %s87 = sphi 0, %s86
      %s101 = sphi 0, %s87
      %s107 = sphi 0, %s109
      %s110 = sphi 0, %s107
      %s111 = sphi 0, %s110
      %s127 = sphi 0, %s111
    $region4: #{tpu_custom_call.1} parent=1 // loop_header_branch
      %18 = sbr.rel (%p16) target = $region8
    $region5: #{tpu_custom_call.1} parent=1 // loop_body
      %s20 = ssub.s32 %s15, 1
      %s21 = ssub.s32 %s15, 2
      %s28 = sadd.s32 1, %s23
      %p29 = scmp.ge.s32.totalorder %s28, 1
      %s30 = scalar_select %p29, 0, %s28
      %s31 = sadd.s32 1, %s22
      %s32 = scalar_select %p29, %s31, %s22
      %p33 = scmp.ge.s32.totalorder %s32, 2
      %s34 = scalar_select %p33, 0, %s32
      %s35 = ssub.s32 %s22, %s34
      %s36 = ssub.s32 %s23, %s30
      %s37 = sor.u32 %s35, %s36
      %p38 = scmp.eq.s32.totalorder %s37, 0
      %s40 = sadd.s32 %s39, 1
      %s41 = scalar_select %p38, %s39, %s40
      %p44 = pneg %p38
      %p45 = scmp.eq.s32.totalorder %s15, 1
      %p46 = por %p44, %p45
      %p47 = scmp.ne.s32.totalorder %s39, %s42
      %p48 = scmp.eq.s32.totalorder %s15, 0
      %p49 = por %p47, %p48
      %p50 = scmp.ne.s32.totalorder %s39, %s42
      %p51 = scmp.eq.s32.totalorder %s20, 1
      %p52 = por %p50, %p51
      %p53 = scmp.ne.s32.totalorder %s42, %s43
      %p54 = scmp.eq.s32.totalorder %s20, 0
      %p55 = por %p53, %p54
      %p56 = scmp.ne.s32.totalorder %s42, %s43
      %p57 = scmp.eq.s32.totalorder %s21, 1
      %p58 = por %p56, %p57
      %p60 = scmp.ne.s32.totalorder %s43, %s59
      %p61 = scmp.eq.s32.totalorder %s21, 0
      %p62 = por %p60, %p61
      %s64 = sadd.s32 %s63, 1
      %p67 = scmp.eq.s32.totalorder %s15, 1
      %p68 = scmp.ne.s32.totalorder %s63, %s65
      %p69 = scmp.eq.s32.totalorder %s15, 0
      %p70 = por %p68, %p69
      %p71 = scmp.ne.s32.totalorder %s63, %s65
      %p72 = scmp.eq.s32.totalorder %s20, 1
      %p73 = por %p71, %p72
      %p74 = scmp.ne.s32.totalorder %s65, %s66
      %p75 = scmp.eq.s32.totalorder %s20, 0
      %p76 = por %p74, %p75
      %p77 = scmp.ne.s32.totalorder %s65, %s66
      %p78 = scmp.eq.s32.totalorder %s21, 1
      %p79 = por %p77, %p78
      %p81 = scmp.ne.s32.totalorder %s66, %s80
      %p82 = scmp.eq.s32.totalorder %s21, 0
      %p83 = por %p81, %p82
      %s85 = sadd.s32 %s84, 1
      %p88 = scmp.eq.s32.totalorder %s15, 1
      %p89 = scmp.ne.s32.totalorder %s84, %s86
      %p90 = scmp.eq.s32.totalorder %s15, 0
      %p91 = por %p89, %p90
      %p92 = scmp.ne.s32.totalorder %s84, %s86
      %p93 = scmp.eq.s32.totalorder %s20, 1
      %p94 = por %p92, %p93
      %p95 = scmp.ne.s32.totalorder %s86, %s87
      %p96 = scmp.eq.s32.totalorder %s20, 0
      %p97 = por %p95, %p96
      %p98 = scmp.ne.s32.totalorder %s86, %s87
      %p99 = scmp.eq.s32.totalorder %s21, 1
      %p100 = por %p98, %p99
      %p102 = scmp.ne.s32.totalorder %s87, %s101
      %p103 = scmp.eq.s32.totalorder %s21, 0
      %p104 = por %p102, %p103
      %s105 = ssub.s32 %s22, %s34
      %p106 = scmp.eq.s32.totalorder %s105, 0
      %s108 = sadd.s32 %s107, 1
      %s109 = scalar_select %p106, %s107, %s108
      %p112 = pneg %p106
      %p113 = scmp.eq.s32.totalorder %s15, 1
      %p114 = por %p112, %p113
      %p115 = scmp.ne.s32.totalorder %s107, %s110
      %p116 = scmp.eq.s32.totalorder %s15, 0
      %p117 = por %p115, %p116
      %p118 = scmp.ne.s32.totalorder %s107, %s110
      %p119 = scmp.eq.s32.totalorder %s20, 1
      %p120 = por %p118, %p119
      %p121 = scmp.ne.s32.totalorder %s110, %s111
      %p122 = scmp.eq.s32.totalorder %s20, 0
      %p123 = por %p121, %p122
      %p124 = scmp.ne.s32.totalorder %s110, %s111
      %p125 = scmp.eq.s32.totalorder %s21, 1
      %p126 = por %p124, %p125
      %p128 = scmp.ne.s32.totalorder %s111, %s127
      %p129 = scmp.eq.s32.totalorder %s21, 0
      %p130 = por %p128, %p129
      %p131 = scmp.le.s32.totalorder 1, %s15
      %p132 = scmp.lt.s32.totalorder %s15, 3
      %p133 = pnand %p131, %p132
      %p134 = pneg %p133
      // Predicated region
      $region9: #{tpu_custom_call.1} parent=5 // pred_check
        _
      $region10: #{tpu_custom_call.1} parent=5 // pred_check_branch
        %136 = sbr.rel (%p133) target = $region12
      $region11: #{tpu_custom_call.1} parent=5 // pred_region
        %s137 = ssub.s32 %s15, 1
        // Predicated region
        $region13: #{tpu_custom_call.1} parent=11 // pred_check
          %p138 = pneg %p76
        $region14: #{tpu_custom_call.1} parent=11 // pred_check_branch
          %140 = sbr.rel (%p138) target = $region16
        $region15: #{tpu_custom_call.1} parent=11 // pred_region
          _
        $region16: #{tpu_custom_call.1} parent=11 // pred_fallthru
          _
        // Predicated region
        $region17: #{tpu_custom_call.1} parent=11 // pred_check
          %p141 = pneg %p97
        $region18: #{tpu_custom_call.1} parent=11 // pred_check_branch
          %143 = sbr.rel (%p141) target = $region20
        $region19: #{tpu_custom_call.1} parent=11 // pred_region
          _
        $region20: #{tpu_custom_call.1} parent=11 // pred_fallthru
          _
      $region12: #{tpu_custom_call.1} parent=5 // pred_fallthru
        _
      %p144 = scmp.lt.s32.totalorder %s15, 2
      // Predicated region
      $region21: #{tpu_custom_call.1} parent=5 // pred_check
        %p145 = pneg %p144
      $region22: #{tpu_custom_call.1} parent=5 // pred_check_branch
        %147 = sbr.rel (%p145) target = $region24
      $region23: #{tpu_custom_call.1} parent=5 // pred_region
        // Predicated region
        $region25: #{tpu_custom_call.1} parent=23 // pred_check
          %p148 = pneg %p49
        $region26: #{tpu_custom_call.1} parent=23 // pred_check_branch
          %150 = sbr.rel (%p148) target = $region28
        $region27: #{tpu_custom_call.1} parent=23 // pred_region
          %s151 = sand.u32 %s39, 1
          %s152 = scalar_lea.sflag [#allocation4], %s151
          %s153 = sand.u32 %s39, 1
          %s154 = smul.addr %s153, 8
          %s155 = scalar_lea.vmem [#allocation3], %s154
          %s157 = ssub.s32 128, 128
          %158 = vsyncadd %s152, %s157
          %s159 = smul.addr %s23, 2
          %s160 = smul.addr %s22, 2
          %s161 = sadd.s32 %s159, %s160
          %s162 = smul.addr %s161, 64
          %s163 = scalar_lea.hbm %s0, %s162
          %s165 = sshll.u32 %s155, 4
          %s166 = int_to_ptr.vmem [resolvable:$true] %s165
          %168 = dma.hbm_to_vmem [thread:$0]  %s163, 128, %s166, %s152
        $region28: #{tpu_custom_call.1} parent=23 // pred_fallthru
          _
      $region24: #{tpu_custom_call.1} parent=5 // pred_fallthru
        _
      %p169 = scmp.le.s32.totalorder 1, %s15
      %p170 = scmp.lt.s32.totalorder %s15, 3
      %p171 = pnand %p169, %p170
      %p172 = pneg %p171
      // Predicated region
      $region29: #{tpu_custom_call.1} parent=5 // pred_check
        _
      $region30: #{tpu_custom_call.1} parent=5 // pred_check_branch
        %174 = sbr.rel (%p171) target = $region32
      $region31: #{tpu_custom_call.1} parent=5 // pred_region
        %s175 = ssub.s32 %s15, 1
        %s176 = sand.u32 %s42, 1
        %s177 = scalar_lea.sflag [#allocation4], %s176
        %s178 = sand.u32 %s42, 1
        %s179 = smul.addr %s178, 8
        %s180 = scalar_lea.vmem [#allocation3], %s179
        // Predicated region
        $region33: #{tpu_custom_call.1} parent=31 // pred_check
          %p181 = pneg %p55
        $region34: #{tpu_custom_call.1} parent=31 // pred_check_branch
          %183 = sbr.rel (%p181) target = $region36
        $region35: #{tpu_custom_call.1} parent=31 // pred_region
          %184 = dma.done %s177, 128
        $region36: #{tpu_custom_call.1} parent=31 // pred_fallthru
          _
        %s185 = sand.u32 %s42, 1
        %s186 = scalar_lea.sflag [#allocation4], %s185
        %s187 = sand.u32 %s42, 1
        %s188 = smul.addr %s187, 8
        %s189 = scalar_lea.vmem [#allocation3], %s188
        %p190 = pneg %p55
        %p191 = pneg %p52
        %p192 = pneg %p76
        %p193 = pneg %p73
        %p194 = pneg %p97
        %p195 = pneg %p94
        %p196 = pneg %p123
        %p197 = pneg %p120
        %s198 = sand.u32 %s110, 1
        %s199 = scalar_lea.sflag [#allocation5], %s198
        %s200 = sand.u32 %s110, 1
        %s201 = smul.addr %s200, 8
        %s202 = scalar_lea.vmem [#allocation6], %s201
        %p203 = scmp.eq.s32.totalorder %s25, 0
        // Predicated region
        $region37: #{tpu_custom_call.1} parent=31 // pred_check
          %p204 = pneg %p203
        $region38: #{tpu_custom_call.1} parent=31 // pred_check_branch
          %206 = sbr.rel (%p204) target = $region40
        $region39: #{tpu_custom_call.1} parent=31 // pred_region
          %vm207 = vcmask 3072
          %208 = vst.msk [vmem:[#allocation2] sm:$0xf] %vm207, 0.0
        $region40: #{tpu_custom_call.1} parent=31 // pred_fallthru
          _
        %v209 = vld [vmem:[%s180] sm:$0xff]
        %v211 = vcombine.high %v209, %v209
        %vm213 = vcmask 1043456
        %v214 = vsel %vm213, %v209, 0.0
        %v215 = vsel %vm213, %v211, 0.0
        %v216 = vadd.f32 %v214, %v215
        %217 = vadd.xlane.f32.xlu0 %v216
        %v218 = vpop.xlane.xlu0 %217
        %s219 = smul.u32 %s25, 4
        %s220 = scalar_lea.vmem %s1, %s219
        %v221 = vld [vmem:[%s220] sm:$0xf]
        %v222 = vld [vmem:[#allocation2] sm:$0xf]
        %vm223 = vcmask 31744
        %v225 = vsel %vm223, %v221, 0
        %v228 = vsel %vm213, %v218, 0
        %230 = vmatprep.subr.mxu0 0.0
        %231 = vmatpush1.msra.mxu0 %v228
        %232 = vmatprep.subr.mxu0 0.0
        %233 = vmatpush1.msra.mxu0 0.0
        %234 = vmatprep.subr.mxu0 0.0
        %235 = vmatpush1.msra.mxu0 0.0
        %236 = vmatprep.subr.mxu0 0.0
        %237 = vmatpush1.msra.mxu0 0.0
        %238 = vmatprep.subr.mxu0 0.0
        %239 = vmatpush1.msra.mxu0 0.0
        %240 = vmatprep.subr.mxu0 0.0
        %241 = vmatpush1.msra.mxu0 0.0
        %242 = vmatprep.subr.mxu0 0.0
        %243 = vmatpush1.msra.mxu0 0.0
        %244 = vmatprep.subr.mxu0 0.0
        %245 = vmatpush1.msra.mxu0 0.0
        %246 = vmatprep.subr.mxu0 0.0
        %247 = vmatpush1.msra.mxu0 0.0
        %248 = vmatprep.subr.mxu0 0.0
        %249 = vmatpush1.msra.mxu0 0.0
        %250 = vmatprep.subr.mxu0 0.0
        %251 = vmatpush1.msra.mxu0 0.0
        %252 = vmatprep.subr.mxu0 0.0
        %253 = vmatpush1.msra.mxu0 0.0
        %254 = vmatprep.subr.mxu0 0.0
        %255 = vmatpush1.msra.mxu0 0.0
        %256 = vmatprep.subr.mxu0 0.0
        %257 = vmatpush1.msra.mxu0 0.0
        %258 = vmatprep.subr.mxu0 0.0
        %259 = vmatpush1.msra.mxu0 0.0
        %260 = vmatprep.subr.mxu0 0.0
        %261 = vmatpush1.msra.mxu0 0.0
        %262 = vmatprep.subr.mxu0 0.0
        %263 = vmatpush1.msra.mxu0 0.0
        %264 = vmatprep.subr.mxu0 0.0
        %265 = vmatpush1.msra.mxu0 0.0
        %266 = vmatprep.subr.mxu0 0.0
        %267 = vmatpush1.msra.mxu0 0.0
        %268 = vmatprep.subr.mxu0 0.0
        %269 = vmatpush1.msra.mxu0 0.0
        %270 = vmatprep.subr.mxu0 0.0
        %271 = vmatpush1.msra.mxu0 0.0
        %272 = vmatprep.subr.mxu0 0.0
        %273 = vmatpush1.msra.mxu0 0.0
        %274 = vmatprep.subr.mxu0 0.0
        %275 = vmatpush1.msra.mxu0 0.0
        %276 = vmatprep.subr.mxu0 0.0
        %277 = vmatpush1.msra.mxu0 0.0
        %278 = vmatprep.subr.mxu0 0.0
        %279 = vmatpush1.msra.mxu0 0.0
        %280 = vmatprep.subr.mxu0 0.0
        %281 = vmatpush1.msra.mxu0 0.0
        %282 = vmatprep.subr.mxu0 0.0
        %283 = vmatpush1.msra.mxu0 0.0
        %284 = vmatprep.subr.mxu0 0.0
        %285 = vmatpush1.msra.mxu0 0.0
        %286 = vmatprep.subr.mxu0 0.0
        %287 = vmatpush1.msra.mxu0 0.0
        %288 = vmatprep.subr.mxu0 0.0
        %289 = vmatpush1.msra.mxu0 0.0
        %290 = vmatprep.subr.mxu0 0.0
        %291 = vmatpush1.msra.mxu0 0.0
        %292 = vmatprep.subr.mxu0 0.0
        %293 = vmatpush1.msra.mxu0 0.0
        %294 = vmatprep.mubr.f32.mxu0 0.0
        %295 = vmatmul.mubr.f32.gmra.mrb[0].mxu0 %v225
        %v296 = vpop.f32.mrb[0].mxu0
        %v297 = vadd.f32 0.0, %v296
        %v298 = vpop.f32.mrb[0].mxu0
        %299 = vdwg.mxu0
        %v300 = vadd.f32 %v222, %v297
        %vm301 = vcmask 3072
        %302 = vst.msk [vmem:[#allocation2] sm:$0xf] %vm301, %v300
        // Predicated region
        $region41: #{tpu_custom_call.1} parent=31 // pred_check
          %p303 = pneg %p203
        $region42: #{tpu_custom_call.1} parent=31 // pred_check_branch
          %305 = sbr.rel (%p303) target = $region44
        $region43: #{tpu_custom_call.1} parent=31 // pred_region
          %v306 = vld [vmem:[#allocation2] sm:$0xf]
          %v307 = vld [vmem:[%s2] sm:$0xf]
          %v308 = vadd.f32 %v306, %v307
          %v309 = vmax.f32 %v308, 0.0
          %311 = vset.pattern.permute.xlu0 0
          %312 = vperm.xlu0 %311, %v309
          %v313 = vpop.permute.xlu0 %312
          %v315 = vunpack.c.l.s4 839922192
          %v316 = vunpack.c.0.s8 %v315
          %v317 = vlaneseq
          %v318 = vshrl.u32 %v317, 7
          %v319 = vsub.s32 %v316, %v318
          %v320 = vrot.slane %v313, %v319
          %322 = vst [vmem:[%s202] sm:$0xff] %v320
        $region44: #{tpu_custom_call.1} parent=31 // pred_fallthru
          _
        %s323 = sand.u32 %s110, 1
        %s324 = scalar_lea.sflag [#allocation5], %s323
        %s325 = sand.u32 %s110, 1
        %s326 = smul.addr %s325, 8
        %s327 = scalar_lea.vmem [#allocation6], %s326
        // Predicated region
        $region45: #{tpu_custom_call.1} parent=31 // pred_check
          %p328 = pneg %p120
        $region46: #{tpu_custom_call.1} parent=31 // pred_check_branch
          %330 = sbr.rel (%p328) target = $region48
        $region47: #{tpu_custom_call.1} parent=31 // pred_region
          %s332 = ssub.s32 128, 128
          %333 = vsyncadd %s324, %s332
          %s334 = smul.addr %s24, 2
          %s335 = smul.addr %s334, 64
          %s336 = scalar_lea.hbm %s3, %s335
          %s338 = sshll.u32 %s327, 4
          %s339 = int_to_ptr.vmem [resolvable:$true] %s338
          %341 = dma.vmem_to_hbm [thread:$0]  %s339, 128, %s336, %s324
        $region48: #{tpu_custom_call.1} parent=31 // pred_fallthru
          _
      $region32: #{tpu_custom_call.1} parent=5 // pred_fallthru
        _
      %p342 = scmp.le.s32.totalorder 2, %s15
      // Predicated region
      $region49: #{tpu_custom_call.1} parent=5 // pred_check
        %p343 = pneg %p342
      $region50: #{tpu_custom_call.1} parent=5 // pred_check_branch
        %345 = sbr.rel (%p343) target = $region52
      $region51: #{tpu_custom_call.1} parent=5 // pred_region
        %s346 = ssub.s32 %s15, 2
        // Predicated region
        $region53: #{tpu_custom_call.1} parent=51 // pred_check
          %p347 = pneg %p126
        $region54: #{tpu_custom_call.1} parent=51 // pred_check_branch
          %349 = sbr.rel (%p347) target = $region56
        $region55: #{tpu_custom_call.1} parent=51 // pred_region
          %s350 = sand.u32 %s111, 1
          %s351 = scalar_lea.sflag [#allocation5], %s350
          %s352 = sand.u32 %s111, 1
          %s353 = smul.addr %s352, 8
          %s354 = scalar_lea.vmem [#allocation6], %s353
          %355 = dma.done %s351, 128
        $region56: #{tpu_custom_call.1} parent=51 // pred_fallthru
          _
      $region52: #{tpu_custom_call.1} parent=5 // pred_fallthru
        _
    $region6: #{tpu_custom_call.1} parent=1 // loop_footer
      %s19 = sadd.s32 1, %s15
    $region7: #{tpu_custom_call.1} parent=1 // loop_footer_branch
      %14 = sbr.rel target = $region3
    $region8: #{tpu_custom_call.1} parent=1 // loop_exit
      _
    %356 = vsyncpa [#allocation4], 1
    %s357 = scalar_lea.sflag [#allocation4], 1
    %358 = vsyncpa %s357, 1
    %359 = vsyncpa [#allocation5], 1
    %s360 = scalar_lea.sflag [#allocation5], 1
    %361 = vsyncpa %s360, 1

</llo_original>
